<compile_context>
chip_gen: v5e
topology: v5e:2x2
jax: 0.10.0
libtpu: 0.0.40
codegen_flags: <defaults>
</compile_context>

<pallas_src>
import functools

import jax
import jax.numpy as jnp
from jax.experimental import pallas as pl
from jax.experimental.pallas import tpu as pltpu

# ----------------------------- configuration --------------------------------
BATCH = 2
IN_CHANNELS = 4
IMG_H = IMG_W = 84
FEATURE_SIZE = 64
FINAL_CONV_SHAPE = (64, 1, 1)
FINAL_CONV_SIZE = FINAL_CONV_SHAPE[0] * FINAL_CONV_SHAPE[1] * FINAL_CONV_SHAPE[2]


def _round_up(x, m):
    return (x + m - 1) // m * m


# --------------------------- Pallas matmul kernel ----------------------------
def _matmul_bias_act_kernel(x_ref, w_ref, b_ref, o_ref, acc_ref, *, activation):
    k = pl.program_id(2)

    @pl.when(k == 0)
    def _init():
        acc_ref[...] = jnp.zeros_like(acc_ref)

    acc_ref[...] += jnp.dot(
        x_ref[...], w_ref[...], preferred_element_type=jnp.float32
    )

    @pl.when(k == pl.num_programs(2) - 1)
    def _finalize():
        out = acc_ref[...] + b_ref[...]  # (TM,TN) + (1,TN) broadcast, f32
        if activation == "relu":
            out = jnp.maximum(out, 0.0)
        elif activation == "sigmoid":
            out = 1.0 / (1.0 + jnp.exp(-out))
        o_ref[...] = out.astype(o_ref.dtype)


def matmul_bias_act(x, w_p, b, activation="none"):
    """act(x @ W + b) with a fused Pallas TPU kernel.

    x:   (M, K)  float, unpadded activations (cast to bf16 + padded here).
    w_p: (Kp,Np) bf16, pre-padded weight (multiples of 128, from _pad_pack).
    b:   (N,)    f32 bias, unpadded (true N carried by its static shape).
    Returns f32 (M, N).
    """
    M, K = x.shape
    Kp, Np = w_p.shape
    N = b.shape[0]
    assert K <= Kp and N <= Np, (K, Kp, N, Np)

    # Full-K / full-N tiles (all GEMMs in this net have Kp<=1280, Np<=256), so
    # the K and N grid axes collapse to a single step; tm grows with M.
    tm = min(1024, _round_up(M, 128))
    Mp = _round_up(M, tm)
    tk = Kp if Kp <= 2048 else max(d for d in (2048, 1024, 512, 256, 128) if Kp % d == 0)
    tn = Np if Np <= 512 else max(d for d in (512, 256, 128) if Np % d == 0)

    xp = jnp.pad(x.astype(jnp.bfloat16), ((0, Mp - M), (0, Kp - K)))
    bp = jnp.pad(b.astype(jnp.float32), (0, Np - N)).reshape(1, Np)

    grid = (Mp // tm, Np // tn, Kp // tk)
    out = pl.pallas_call(
        functools.partial(_matmul_bias_act_kernel, activation=activation),
        out_shape=jax.ShapeDtypeStruct((Mp, Np), jnp.float32),
        grid_spec=pltpu.PrefetchScalarGridSpec(
            num_scalar_prefetch=0,
            grid=grid,
            in_specs=[
                pl.BlockSpec((tm, tk), lambda i, j, k: (i, k)),
                pl.BlockSpec((tk, tn), lambda i, j, k: (k, j)),
                pl.BlockSpec((1, tn), lambda i, j, k: (0, j)),
            ],
            out_specs=pl.BlockSpec((tm, tn), lambda i, j, k: (i, j)),
            scratch_shapes=[pltpu.VMEM((tm, tn), jnp.float32)],
        ),
        compiler_params=pltpu.CompilerParams(
            dimension_semantics=("parallel", "parallel", "arbitrary")
        ),
    )(xp, w_p, bp)
    return out[:M, :N]


# ------------------------- one-time weight packing ---------------------------
def _pad_pack(wmat, b):
    """(K,N) weight -> pre-padded bf16 (Kp,Np); bias kept unpadded f32 (N,)."""
    K, N = wmat.shape
    Kp, Np = _round_up(K, 128), _round_up(N, 128)
    w_p = jnp.pad(wmat.astype(jnp.float32), ((0, Kp - K), (0, Np - N))).astype(
        jnp.bfloat16
    )
    return {"w": w_p, "b": b.astype(jnp.float32)}


def pack_conv(w, b):
    """nn.Conv2d weight (Cout,Cin,kh,kw) -> (kh*kw*Cin, Cout) in (dy,dx,ci) order."""
    Cout, Cin, kh, kw = w.shape
    wmat = jnp.transpose(w, (2, 3, 1, 0)).reshape(kh * kw * Cin, Cout)
    return _pad_pack(wmat, b)


def pack_conv_transpose(w, b, stride):
    """nn.ConvTranspose2d weight (Cin,Cout,kh,kw) -> phase-packed matrix.

    Rows:    (dy, dx, ci)  over the (nk, nk) stride-1 sub-kernel window.
    Columns: (ry, rx, co)  over the s*s output phases.
    wmat[(dy*nk+dx)*Cin+ci, (ry*s+rx)*Cout+co] = w[ci,co,(nk-1-dy)*s+ry,(nk-1-dx)*s+rx]
    """
    Cin, Cout, kh, kw = w.shape
    s = stride
    nk = -(-kh // s)
    assert kh == nk * s and kw == nk * s, "kernel size must be a multiple of stride"
    wt = jnp.transpose(w, (2, 3, 0, 1))                 # (kh, kw, Cin, Cout)
    wr = wt.reshape(nk, s, nk, s, Cin, Cout)            # [ty, ry, tx, rx, ci, co]
    wsub = wr[::-1, :, ::-1, :, :, :]                   # flip taps -> [dy, ry, dx, rx, ...]
    wsub = jnp.transpose(wsub, (0, 2, 4, 1, 3, 5))      # [dy, dx, ci, ry, rx, co]
    wmat = wsub.reshape(nk * nk * Cin, s * s * Cout)
    return _pad_pack(wmat, jnp.tile(b, s * s))          # same bias for every phase


def pack_linear(w, b):
    """nn.Linear weight (out, in) -> (in, out)."""
    return _pad_pack(jnp.transpose(w), b)


def pack_params(p):
    """One-time repack of PyTorch-layout params into matmul-ready bf16 matrices."""
    return {
        "c1": pack_conv(p["c1_w"], p["c1_b"]),
        "c2": pack_conv(p["c2_w"], p["c2_b"]),
        "c3": pack_conv(p["c3_w"], p["c3_b"]),
        "c4": pack_conv(p["c4_w"], p["c4_b"]),
        # mu and logvar heads fused column-wise into one N=128 GEMM
        "fc_logvar": pack_linear(
            jnp.concatenate([p["fc_w"], p["logvar_w"]], axis=0),
            jnp.concatenate([p["fc_b"], p["logvar_b"]], axis=0),
        ),
        "dlin": pack_linear(p["dlin_w"], p["dlin_b"]),
        "dc1": pack_conv_transpose(p["dc1_w"], p["dc1_b"], 1),
        "dc2": pack_conv_transpose(p["dc2_w"], p["dc2_b"], 2),
        "dc3": pack_conv_transpose(p["dc3_w"], p["dc3_b"], 2),
        "dc4": pack_conv_transpose(p["dc4_w"], p["dc4_b"], 4),
    }


# --------------------------- conv glue (im2col) ------------------------------
def _im2col(x, kh, kw, sh, sw):
    """x: (N,H,W,C) -> patches (N,Ho,Wo,kh*kw*C) flattened in (dy,dx,c) order."""
    N, H, W, C = x.shape
    Ho = (H - kh) // sh + 1
    Wo = (W - kw) // sw + 1
    cols = []
    for dy in range(kh):
        for dx in range(kw):
            cols.append(
                x[:, dy : dy + sh * (Ho - 1) + 1 : sh, dx : dx + sw * (Wo - 1) + 1 : sw, :]
            )
    patches = jnp.stack(cols, axis=3)  # (N,Ho,Wo,kh*kw,C)
    return patches.reshape(N, Ho, Wo, kh * kw * C), Ho, Wo


def conv2d(x, packed, kernel, stride, activation):
    """x: (N,H,W,Cin) NHWC; packed weights from pack_conv; valid padding."""
    N = x.shape[0]
    Cin = x.shape[-1]
    Cout = packed["b"].shape[0]
    patches, Ho, Wo = _im2col(x, kernel, kernel, stride, stride)
    xmat = patches.reshape(N * Ho * Wo, kernel * kernel * Cin)
    out = matmul_bias_act(xmat, packed["w"], packed["b"], activation)
    return out.reshape(N, Ho, Wo, Cout)


def conv_transpose2d(x, packed, kernel, stride, output_padding, activation):
    """Phase-decomposed ConvTranspose2d (padding=0), matching PyTorch semantics.

    Output oy = qy*s + ry gets  sum_{ty,tx,ci} x[qy-ty, qx-tx, ci] *
    w[ci, co, ty*s+ry, tx*s+rx]; all s*s phases share one stride-1 im2col over x
    (window nk = k/s) and are computed as extra output columns of one GEMM,
    then interleaved back to full resolution.
    """
    N, H, W, Cin = x.shape
    s = stride
    k = kernel
    oph, opw = output_padding
    Ho = (H - 1) * s + k + oph
    Wo = (W - 1) * s + k + opw
    nk = -(-k // s)
    Q = -(-Ho // s)
    Qw = -(-Wo // s)
    Cout = packed["b"].shape[0] // (s * s)

    # zero-pad so a stride-1 valid window of size nk yields exactly (Q, Qw) rows
    xp = jnp.pad(x, ((0, 0), (nk - 1, Q - H), (nk - 1, Qw - W), (0, 0)))
    patches, qh, qw = _im2col(xp, nk, nk, 1, 1)  # qh == Q, qw == Qw
    xmat = patches.reshape(N * Q * Qw, nk * nk * Cin)

    out = matmul_bias_act(xmat, packed["w"], packed["b"], activation)  # (M, s*s*Cout)
    out = out.reshape(N, Q, Qw, s, s, Cout)
    out = jnp.transpose(out, (0, 1, 3, 2, 4, 5)).reshape(N, Q * s, Qw * s, Cout)
    return out[:, :Ho, :Wo, :]


# ------------------------------- parameters ----------------------------------
def init_params(key):
    keys = jax.random.split(key, 14)

    def w(k, shape, scale=0.05):
        return (scale * jax.random.normal(k, shape)).astype(jnp.float32)

    z = lambda n: jnp.zeros((n,), jnp.float32)
    p = {}
    # encoder (NatureCNN conv stack, then Linear -> mu)
    p["c1_w"], p["c1_b"] = w(keys[0], (32, IN_CHANNELS, 8, 8)), z(32)
    p["c2_w"], p["c2_b"] = w(keys[1], (64, 32, 4, 4)), z(64)
    p["c3_w"], p["c3_b"] = w(keys[2], (128, 64, 4, 4)), z(128)
    p["c4_w"], p["c4_b"] = w(keys[3], (64, 128, 3, 3)), z(64)
    p["fc_w"], p["fc_b"] = w(keys[4], (FEATURE_SIZE, FINAL_CONV_SIZE)), w(
        keys[5], (FEATURE_SIZE,), 0.01
    )
    # AE.logvar_fc
    p["logvar_w"], p["logvar_b"] = w(keys[6], (FEATURE_SIZE, FINAL_CONV_SIZE)), w(
        keys[7], (FEATURE_SIZE,), 0.01
    )
    # decoder
    p["dlin_w"], p["dlin_b"] = w(keys[8], (FINAL_CONV_SIZE, FEATURE_SIZE)), w(
        keys[9], (FINAL_CONV_SIZE,), 0.01
    )
    p["dc1_w"], p["dc1_b"] = w(keys[10], (64, 128, 3, 3)), z(128)
    p["dc2_w"], p["dc2_b"] = w(keys[11], (128, 64, 4, 4)), z(64)
    p["dc3_w"], p["dc3_b"] = w(keys[12], (64, 32, 4, 4)), z(32)
    p["dc4_w"], p["dc4_b"] = w(keys[13], (32, IN_CHANNELS, 8, 8)), z(IN_CHANNELS)
    return p


# -------------------------------- forward ------------------------------------
def ae_forward(packed, x, eps=None):
    """Reproduces AE.forward.  Returns (z, mu, dist=(mu, std), x_hat).
    If `eps` is given, z = mu + std * eps (Normal(mu,std).rsample()); else z = mu
    (eval mode)."""
    N = x.shape[0]
    h = jnp.transpose(x, (0, 2, 3, 1)).astype(jnp.float32)  # NCHW -> NHWC
    # encoder.main[:-1]: conv stack (+ReLU) + Flatten
    h = conv2d(h, packed["c1"], 8, 4, "relu")
    h = conv2d(h, packed["c2"], 4, 2, "relu")
    h = conv2d(h, packed["c3"], 4, 2, "relu")
    h = conv2d(h, packed["c4"], 3, 1, "relu")
    final_conv = jnp.transpose(h, (0, 3, 1, 2)).reshape(N, -1)  # Flatten (C,H,W)

    # mu = encoder.main[-1](final_conv); logvar = logvar_fc(final_conv)  (fused GEMM)
    mulog = matmul_bias_act(final_conv, packed["fc_logvar"]["w"],
                            packed["fc_logvar"]["b"], "none")
    mu = mulog[:, :FEATURE_SIZE]
    logvar = mulog[:, FEATURE_SIZE:]
    std = jax.nn.softplus(logvar)  # F.softplus
    # TODO(synk): torch.distributions.Normal object has no Pallas equivalent;
    # dist is returned as its sufficient statistics (mu, std) and rsample's RNG
    # draw is supplied externally via `eps`.
    z = mu if eps is None else mu + std * eps

    # decoder: Linear + ReLU, Unflatten, 4x ConvTranspose (+ReLU / Sigmoid)
    d = matmul_bias_act(z, packed["dlin"]["w"], packed["dlin"]["b"], "relu")
    Cf, Hf, Wf = FINAL_CONV_SHAPE
    d = jnp.transpose(d.reshape(N, Cf, Hf, Wf), (0, 2, 3, 1))  # Unflatten -> NHWC
    d = conv_transpose2d(d, packed["dc1"], 3, 1, (0, 0), "relu")
    d = conv_transpose2d(d, packed["dc2"], 4, 2, (0, 0), "relu")
    d = conv_transpose2d(d, packed["dc3"], 4, 2, (1, 1), "relu")
    d = conv_transpose2d(d, packed["dc4"], 8, 4, (2, 0), "sigmoid")
    x_hat = jnp.transpose(d, (0, 3, 1, 2))  # NHWC -> NCHW

    dist = (mu, std)
    return z, mu, dist, x_hat


# --------------------------------- main ---------------------------------------
if __name__ == "__main__":
    key = jax.random.PRNGKey(0)
    pkey, xkey, ckey = jax.random.split(key, 3)

    params = init_params(pkey)
    packed = pack_params(params)  # one-time weight repack / pad / bf16 cast
    x = jax.random.uniform(xkey, (BATCH, IN_CHANNELS, IMG_H, IMG_W), jnp.float32)

    k1, k2, k3, k4, k5, k6, k7, k8, k9 = jax.random.split(ckey, 9)

    # ---- check 1: fused Pallas matmul (bf16 operands, f32 acc) vs bf16 ref ----
    xa = jax.random.normal(k1, (37, 70), jnp.float32)
    wa = jax.random.normal(k2, (70, 19), jnp.float32)
    ba = jax.random.normal(k3, (19,), jnp.float32)
    pk = _pad_pack(wa, ba)
    got = matmul_bias_act(xa, pk["w"], pk["b"], "relu")
    ref = jnp.maximum(
        jnp.dot(xa.astype(jnp.bfloat16), wa.astype(jnp.bfloat16),
                preferred_element_type=jnp.float32) + ba[None, :], 0.0)
    assert jnp.allclose(got, ref, atol=2e-2, rtol=2e-2), "matmul kernel mismatch"

    # ---- check 2: phase-decomposed ConvTranspose2d vs lax reference ----
    def ref_conv_transpose(x_nhwc, w, b, stride, output_padding):
        Cin_, Cout_, kh, kw = w.shape
        oph, opw = output_padding
        y = jax.lax.conv_general_dilated(
            x_nhwc.astype(jnp.float32),
            jnp.transpose(w[:, :, ::-1, ::-1], (2, 3, 0, 1)).astype(jnp.float32),
            window_strides=(1, 1),
            padding=((kh - 1, kh - 1 + oph), (kw - 1, kw - 1 + opw)),
            lhs_dilation=(stride, stride),
            dimension_numbers=("NHWC", "HWIO", "NHWC"))
        return y + b[None, None, None, :]

    xct = jax.random.normal(k4, (2, 5, 4, 6), jnp.float32)
    wct = 0.05 * jax.random.normal(k5, (6, 3, 8, 8), jnp.float32)
    bct = 0.1 * jax.random.normal(k6, (3,), jnp.float32)
    got_ct = conv_transpose2d(xct, pack_conv_transpose(wct, bct, 4), 8, 4, (2, 0), "none")
    ref_ct = ref_conv_transpose(xct, wct, bct, 4, (2, 0))
    assert got_ct.shape == ref_ct.shape
    assert jnp.allclose(got_ct, ref_ct, atol=2e-2, rtol=2e-2), "conv_transpose mismatch"
    got_ct1 = conv_transpose2d(
        xct[:, :1, :1, :], pack_conv_transpose(wct[:, :, :3, :3], bct, 1), 3, 1, (0, 0), "none")
    ref_ct1 = ref_conv_transpose(xct[:, :1, :1, :], wct[:, :, :3, :3], bct, 1, (0, 0))
    assert jnp.allclose(got_ct1, ref_ct1, atol=2e-2, rtol=2e-2), "stride-1 convT mismatch"

    # ---- check 3: im2col conv2d vs lax reference ----
    def ref_conv2d(x_nhwc, w, b, stride):
        y = jax.lax.conv_general_dilated(
            x_nhwc.astype(jnp.float32),
            jnp.transpose(w, (2, 3, 1, 0)).astype(jnp.float32),
            window_strides=(stride, stride), padding="VALID",
            dimension_numbers=("NHWC", "HWIO", "NHWC"))
        return y + b[None, None, None, :]

    xcc = jax.random.normal(k7, (2, 11, 11, 5), jnp.float32)
    wcc = 0.05 * jax.random.normal(k8, (7, 5, 4, 4), jnp.float32)
    bcc = 0.1 * jax.random.normal(k9, (7,), jnp.float32)
    got_cc = conv2d(xcc, pack_conv(wcc, bcc), 4, 2, "none")
    assert jnp.allclose(got_cc, ref_conv2d(xcc, wcc, bcc, 2), atol=2e-2, rtol=2e-2), \
        "conv2d mismatch"

    # ---- full AE forward ----
    fwd = jax.jit(ae_forward)
    z, mu, (mu_d, std_d), x_hat = fwd(packed, x)
    jax.block_until_ready(x_hat)

    assert z.shape == (BATCH, FEATURE_SIZE)
    assert mu.shape == (BATCH, FEATURE_SIZE)
    assert std_d.shape == (BATCH, FEATURE_SIZE)
    assert x_hat.shape == (BATCH, IN_CHANNELS, 82, 80)  # decoder output for 84x84 input
    assert bool(jnp.all(jnp.isfinite(x_hat)))
    assert bool(jnp.all((x_hat >= 0.0) & (x_hat <= 1.0)))  # sigmoid output range
    assert bool(jnp.all(std_d > 0.0))                       # softplus output range

    print("KERNEL_OK")
</pallas_src>

<mosaic_0001>
module attributes {stable_mosaic.version = 11 : i64} {
  func.func @_matmul_bias_act_kernel(%arg0: i32, %arg1: i32, %arg2: i32, %arg3: memref<128x128xbf16, #tpu.memory_space<vmem>>, %arg4: memref<128x128xbf16, #tpu.memory_space<vmem>>, %arg5: memref<1x128xf32, #tpu.memory_space<vmem>>, %arg6: memref<128x128xf32, #tpu.memory_space<vmem>>, %arg7: memref<128x128xf32, #tpu.memory_space<vmem>>) attributes {dimension_semantics = [#tpu.dimension_semantics<parallel>, #tpu.dimension_semantics<parallel>, #tpu.dimension_semantics<arbitrary>], iteration_bounds = array<i64: 1, 1, 1>, scalar_prefetch = 0 : i64, scratch_operands = 1 : i64, tpu.core_type = #tpu.core_type<tc>, window_params = [{transform_indices = @transform_0, window_bounds = array<i64: 128, 128>}, {transform_indices = @transform_1, window_bounds = array<i64: 128, 128>}, {transform_indices = @transform_2, window_bounds = array<i64: 1, 128>}, {transform_indices = @transform_3, window_bounds = array<i64: 128, 128>}]} {
    %c0_i32 = arith.constant 0 : i32
    %0 = arith.cmpi eq, %arg2, %c0_i32 : i32
    %1 = arith.extui %0 : i1 to i32
    %c0_i32_0 = arith.constant 0 : i32
    %2 = arith.cmpi ne, %1, %c0_i32_0 : i32
    scf.if %2 {
      %cst_10 = arith.constant 0.000000e+00 : f32
      %12 = vector.broadcast %cst_10 : f32 to vector<128x128xf32>
      %c0_11 = arith.constant 0 : index
      %c0_12 = arith.constant 0 : index
      %13 = vector.load %arg7[%c0_11, %c0_12] : memref<128x128xf32, #tpu.memory_space<vmem>>, vector<128x128xf32>
      tpu.vector_store %arg7[%c0_11, %c0_12], %12 {strides = array<i32>} : memref<128x128xf32, #tpu.memory_space<vmem>>, vector<128x128xf32>,
    } else {
    }
    %c0 = arith.constant 0 : index
    %c0_1 = arith.constant 0 : index
    %3 = vector.load %arg7[%c0, %c0_1] : memref<128x128xf32, #tpu.memory_space<vmem>>, vector<128x128xf32>
    %c0_2 = arith.constant 0 : index
    %c0_3 = arith.constant 0 : index
    %4 = vector.load %arg3[%c0_2, %c0_3] : memref<128x128xbf16, #tpu.memory_space<vmem>>, vector<128x128xbf16>
    %c0_4 = arith.constant 0 : index
    %c0_5 = arith.constant 0 : index
    %5 = vector.load %arg4[%c0_4, %c0_5] : memref<128x128xbf16, #tpu.memory_space<vmem>>, vector<128x128xbf16>
    %cst = arith.constant dense<0.000000e+00> : vector<128x128xf32>
    %6 = tpu.matmul %4, %5, %cst {dimension_numbers = #tpu.dot_dimension_numbers<[1], [0], [0], [1], [0, 0, 1, 1], [], []>} : vector<128x128xbf16>, vector<128x128xbf16>, vector<128x128xf32> -> vector<128x128xf32>
    %7 = arith.addf %3, %6 : vector<128x128xf32>
    %c0_6 = arith.constant 0 : index
    %c0_7 = arith.constant 0 : index
    %8 = vector.load %arg7[%c0_6, %c0_7] : memref<128x128xf32, #tpu.memory_space<vmem>>, vector<128x128xf32>
    tpu.vector_store %arg7[%c0_6, %c0_7], %7 {strides = array<i32>} : memref<128x128xf32, #tpu.memory_space<vmem>>, vector<128x128xf32>,
    %c0_i32_8 = arith.constant 0 : i32
    %9 = arith.cmpi eq, %arg2, %c0_i32_8 : i32
    %10 = arith.extui %9 : i1 to i32
    %c0_i32_9 = arith.constant 0 : i32
    %11 = arith.cmpi ne, %10, %c0_i32_9 : i32
    scf.if %11 {
      %c0_10 = arith.constant 0 : index
      %c0_11 = arith.constant 0 : index
      %12 = vector.load %arg7[%c0_10, %c0_11] : memref<128x128xf32, #tpu.memory_space<vmem>>, vector<128x128xf32>
      %c0_12 = arith.constant 0 : index
      %c0_13 = arith.constant 0 : index
      %13 = vector.load %arg5[%c0_12, %c0_13] : memref<1x128xf32, #tpu.memory_space<vmem>>, vector<1x128xf32>
      %14 = vector.broadcast %13 : vector<1x128xf32> to vector<128x128xf32>
      %15 = arith.addf %12, %14 : vector<128x128xf32>
      %cst_14 = arith.constant 0.000000e+00 : f32
      %16 = vector.broadcast %cst_14 : f32 to vector<128x128xf32>
      %17 = arith.maximumf %15, %16 : vector<128x128xf32>
      %c0_15 = arith.constant 0 : index
      %c0_16 = arith.constant 0 : index
      %18 = vector.load %arg6[%c0_15, %c0_16] : memref<128x128xf32, #tpu.memory_space<vmem>>, vector<128x128xf32>
      tpu.vector_store %arg6[%c0_15, %c0_16], %17 {strides = array<i32>} : memref<128x128xf32, #tpu.memory_space<vmem>>, vector<128x128xf32>,
    } else {
    }
    return
  }
  func.func @transform_0(%arg0: i32, %arg1: i32, %arg2: i32) -> (i32, i32) {
    %c0_i32 = arith.constant 0 : i32
    return %arg0, %arg2 : i32, i32
  }
  func.func @transform_1(%arg0: i32, %arg1: i32, %arg2: i32) -> (i32, i32) {
    %c0_i32 = arith.constant 0 : i32
    return %arg2, %arg1 : i32, i32
  }
  func.func @transform_2(%arg0: i32, %arg1: i32, %arg2: i32) -> (i32, i32) {
    %c0_i32 = arith.constant 0 : i32
    %c0_i32_0 = arith.constant 0 : i32
    return %c0_i32, %arg1 : i32, i32
  }
  func.func @transform_3(%arg0: i32, %arg1: i32, %arg2: i32) -> (i32, i32) {
    %c0_i32 = arith.constant 0 : i32
    return %arg0, %arg1 : i32, i32
  }
}

</mosaic_0001>

<llo_original>
// kernel: tpu_custom_call.1
$region0: #{tpu_custom_call.1}
  #allocation0 [shape = 'u32[]', space=smem, size = 0x4, offset = 0x4, fixed_abs, tag = 'smem constant byte address 0x4 - core index']
  #allocation1 [shape = 'u32[72,128]{1,0:T(1,128)}', space=vmem, size = 0x9000, scoped, tag = 'internal scratch']
  #allocation2 [shape = 'f32[128,128]{1,0:T(8,128)}', space=vmem, size = 0x10000, scoped, tag = 'scratch operand']
  %s0 = inlined_call_operand.hbm [shape: bf16[128,128], index: 0, kind: input, shape index: {}]
  %s1 = inlined_call_operand.hbm [shape: bf16[128,128], index: 1, kind: input, shape index: {}]
  %s2 = inlined_call_operand.vmem [shape: f32[1,128], index: 2, kind: input, shape index: {}]
  %s3 = inlined_call_operand.hbm [shape: f32[128,128], index: 3, kind: output, shape index: {}]
  %s4 = sld [smem:[#allocation0]]
  $region38: #{tpu_custom_call.1} parent=0
    _
  %s6 = ssub.s32 1, %s4
  %s7 = scalar_select 0, %s6, %s4
  $region1: #{tpu_custom_call.1} parent=0
    #allocation3 [shape = 'u8[32768]{0}', space=vmem, size = 0x8000, scoped, tag = 'input window, operand 0, single buffered']
    #allocation4 [shape = 's32[1]{0}', space=sflag, size = 0x4, scoped, tag = 'scoped memory for tpu_custom_call.1']
    #allocation5 [shape = 's32[1]{0}', space=sflag, size = 0x4, scoped, tag = 'scoped memory for tpu_custom_call.1']
    #allocation6 [shape = 'u8[32768]{0}', space=vmem, size = 0x8000, scoped, tag = 'input window, operand 1, single buffered']
    #allocation7 [shape = 's32[1]{0}', space=sflag, size = 0x4, scoped, tag = 'scoped memory for tpu_custom_call.1']
    #allocation8 [shape = 'u8[65536]{0}', space=vmem, size = 0x10000, scoped, tag = 'output window, operand 0, single buffered']
    %8 = vsyncpa [#allocation4], 0
    %9 = vsyncpa [#allocation7], 0
    %10 = vsyncpa [#allocation5], 0
    // Predicated region
    $region2: #{tpu_custom_call.1} parent=1 // pred_check
      _
    $region3: #{tpu_custom_call.1} parent=1 // pred_check_branch
      %12 = sbr.rel (0) target = $region5
    $region4: #{tpu_custom_call.1} parent=1 // pred_region
      %14 = vsyncadd [#allocation4], 0
      %s15 = sshll.u32 %s0, 4
      %s16 = int_to_ptr.hbm [resolvable:$true] %s15
      %s17 = sshll.u32 [#allocation3], 4
      %s18 = int_to_ptr.vmem [resolvable:$true] %s17
      %23 = dma.hbm_to_vmem [thread:$0]  %s16, 1024, %s18, [#allocation4], 64, 64, 4
    $region5: #{tpu_custom_call.1} parent=1 // pred_fallthru
      _
    // Predicated region
    $region6: #{tpu_custom_call.1} parent=1 // pred_check
      _
    $region7: #{tpu_custom_call.1} parent=1 // pred_check_branch
      %25 = sbr.rel (0) target = $region9
    $region8: #{tpu_custom_call.1} parent=1 // pred_region
      %27 = vsyncadd [#allocation7], 0
      %s28 = sshll.u32 %s1, 4
      %s29 = int_to_ptr.hbm [resolvable:$true] %s28
      %s30 = sshll.u32 [#allocation6], 4
      %s31 = int_to_ptr.vmem [resolvable:$true] %s30
      %36 = dma.hbm_to_vmem [thread:$0]  %s29, 1024, %s31, [#allocation7], 64, 64, 4
    $region9: #{tpu_custom_call.1} parent=1 // pred_fallthru
      _
    // Predicated region
    $region10: #{tpu_custom_call.1} parent=1 // pred_check
      _
    $region11: #{tpu_custom_call.1} parent=1 // pred_check_branch
      %38 = sbr.rel (0) target = $region13
    $region12: #{tpu_custom_call.1} parent=1 // pred_region
      _
    $region13: #{tpu_custom_call.1} parent=1 // pred_fallthru
      _
    // Predicated region
    $region14: #{tpu_custom_call.1} parent=1 // pred_check
      _
    $region15: #{tpu_custom_call.1} parent=1 // pred_check_branch
      %40 = sbr.rel (0) target = $region17
    $region16: #{tpu_custom_call.1} parent=1 // pred_region
      %42 = dma.done [#allocation4], 1024
    $region17: #{tpu_custom_call.1} parent=1 // pred_fallthru
      _
    // Predicated region
    $region18: #{tpu_custom_call.1} parent=1 // pred_check
      _
    $region19: #{tpu_custom_call.1} parent=1 // pred_check_branch
      %44 = sbr.rel (0) target = $region21
    $region20: #{tpu_custom_call.1} parent=1 // pred_region
      %46 = dma.done [#allocation7], 1024
    $region21: #{tpu_custom_call.1} parent=1 // pred_fallthru
      _
    %p47 = scmp.eq.s32.totalorder 0, 0
    // Predicated region
    $region22: #{tpu_custom_call.1} parent=1 // pred_check
      %p48 = pneg %p47
    $region23: #{tpu_custom_call.1} parent=1 // pred_check_branch
      %50 = sbr.rel (%p48) target = $region25
    $region24: #{tpu_custom_call.1} parent=1 // pred_region
      %51 = vst [vmem:[#allocation2] sm:$0xff] 0.0
      %52 = vst [vmem:[#allocation2 + $0x8] sm:$0xff] 0.0
      %53 = vst [vmem:[#allocation2 + $0x10] sm:$0xff] 0.0
      %54 = vst [vmem:[#allocation2 + $0x18] sm:$0xff] 0.0
      %55 = vst [vmem:[#allocation2 + $0x20] sm:$0xff] 0.0
      %56 = vst [vmem:[#allocation2 + $0x28] sm:$0xff] 0.0
      %57 = vst [vmem:[#allocation2 + $0x30] sm:$0xff] 0.0
      %58 = vst [vmem:[#allocation2 + $0x38] sm:$0xff] 0.0
      %59 = vst [vmem:[#allocation2 + $0x40] sm:$0xff] 0.0
      %60 = vst [vmem:[#allocation2 + $0x48] sm:$0xff] 0.0
      %61 = vst [vmem:[#allocation2 + $0x50] sm:$0xff] 0.0
      %62 = vst [vmem:[#allocation2 + $0x58] sm:$0xff] 0.0
      %63 = vst [vmem:[#allocation2 + $0x60] sm:$0xff] 0.0
      %64 = vst [vmem:[#allocation2 + $0x68] sm:$0xff] 0.0
      %65 = vst [vmem:[#allocation2 + $0x70] sm:$0xff] 0.0
      %66 = vst [vmem:[#allocation2 + $0x78] sm:$0xff] 0.0
    $region25: #{tpu_custom_call.1} parent=1 // pred_fallthru
      _
    %v67 = vld [vmem:[#allocation2] sm:$0xff]
    %v68 = vld [vmem:[#allocation2 + $0x8] sm:$0xff]
    %v69 = vld [vmem:[#allocation2 + $0x10] sm:$0xff]
    %v70 = vld [vmem:[#allocation2 + $0x18] sm:$0xff]
    %v71 = vld [vmem:[#allocation2 + $0x20] sm:$0xff]
    %v72 = vld [vmem:[#allocation2 + $0x28] sm:$0xff]
    %v73 = vld [vmem:[#allocation2 + $0x30] sm:$0xff]
    %v74 = vld [vmem:[#allocation2 + $0x38] sm:$0xff]
    %v75 = vld [vmem:[#allocation2 + $0x40] sm:$0xff]
    %v76 = vld [vmem:[#allocation2 + $0x48] sm:$0xff]
    %v77 = vld [vmem:[#allocation2 + $0x50] sm:$0xff]
    %v78 = vld [vmem:[#allocation2 + $0x58] sm:$0xff]
    %v79 = vld [vmem:[#allocation2 + $0x60] sm:$0xff]
    %v80 = vld [vmem:[#allocation2 + $0x68] sm:$0xff]
    %v81 = vld [vmem:[#allocation2 + $0x70] sm:$0xff]
    %v82 = vld [vmem:[#allocation2 + $0x78] sm:$0xff]
    %v83 = vld [vmem:[#allocation3] sm:$0xf]
    %v84 = vld [vmem:[#allocation3 + $0x4] sm:$0xf]
    %v85 = vld [vmem:[#allocation3 + $0x8] sm:$0xf]
    %v86 = vld [vmem:[#allocation3 + $0xc] sm:$0xf]
    %v87 = vld [vmem:[#allocation3 + $0x10] sm:$0xf]
    %v88 = vld [vmem:[#allocation3 + $0x14] sm:$0xf]
    %v89 = vld [vmem:[#allocation3 + $0x18] sm:$0xf]
    %v90 = vld [vmem:[#allocation3 + $0x1c] sm:$0xf]
    %v91 = vld [vmem:[#allocation3 + $0x20] sm:$0xf]
    %v92 = vld [vmem:[#allocation3 + $0x24] sm:$0xf]
    %v93 = vld [vmem:[#allocation3 + $0x28] sm:$0xf]
    %v94 = vld [vmem:[#allocation3 + $0x2c] sm:$0xf]
    %v95 = vld [vmem:[#allocation3 + $0x30] sm:$0xf]
    %v96 = vld [vmem:[#allocation3 + $0x34] sm:$0xf]
    %v97 = vld [vmem:[#allocation3 + $0x38] sm:$0xf]
    %v98 = vld [vmem:[#allocation3 + $0x3c] sm:$0xf]
    %v99 = vld [vmem:[#allocation6] sm:$0xf]
    %v100 = vld [vmem:[#allocation6 + $0x4] sm:$0xf]
    %v101 = vld [vmem:[#allocation6 + $0x8] sm:$0xf]
    %v102 = vld [vmem:[#allocation6 + $0xc] sm:$0xf]
    %v103 = vld [vmem:[#allocation6 + $0x10] sm:$0xf]
    %v104 = vld [vmem:[#allocation6 + $0x14] sm:$0xf]
    %v105 = vld [vmem:[#allocation6 + $0x18] sm:$0xf]
    %v106 = vld [vmem:[#allocation6 + $0x1c] sm:$0xf]
    %v107 = vld [vmem:[#allocation6 + $0x20] sm:$0xf]
    %v108 = vld [vmem:[#allocation6 + $0x24] sm:$0xf]
    %v109 = vld [vmem:[#allocation6 + $0x28] sm:$0xf]
    %v110 = vld [vmem:[#allocation6 + $0x2c] sm:$0xf]
    %v111 = vld [vmem:[#allocation6 + $0x30] sm:$0xf]
    %v112 = vld [vmem:[#allocation6 + $0x34] sm:$0xf]
    %v113 = vld [vmem:[#allocation6 + $0x38] sm:$0xf]
    %v114 = vld [vmem:[#allocation6 + $0x3c] sm:$0xf]
    %v131 = vunpack.c.l.b16 %v83
    %v132 = vunpack.c.l.b16 %v84
    %v133 = vunpack.c.l.b16 %v85
    %v134 = vunpack.c.l.b16 %v86
    %v135 = vunpack.c.l.b16 %v87
    %v136 = vunpack.c.l.b16 %v88
    %v137 = vunpack.c.l.b16 %v89
    %v138 = vunpack.c.l.b16 %v90
    %v139 = vunpack.c.l.b16 %v91
    %v140 = vunpack.c.l.b16 %v92
    %v141 = vunpack.c.l.b16 %v93
    %v142 = vunpack.c.l.b16 %v94
    %v143 = vunpack.c.l.b16 %v95
    %v144 = vunpack.c.l.b16 %v96
    %v145 = vunpack.c.l.b16 %v97
    %v146 = vunpack.c.l.b16 %v98
    %v147 = vpack.c.b16 %v132, %v131
    %v148 = vpack.c.b16 %v134, %v133
    %v149 = vpack.c.b16 %v136, %v135
    %v150 = vpack.c.b16 %v138, %v137
    %v151 = vpack.c.b16 %v140, %v139
    %v152 = vpack.c.b16 %v142, %v141
    %v153 = vpack.c.b16 %v144, %v143
    %v154 = vpack.c.b16 %v146, %v145
    %v179 = vunpack.c.l.b16 %v99
    %v180 = vunpack.c.l.b16 %v100
    %v181 = vunpack.c.l.b16 %v101
    %v182 = vunpack.c.l.b16 %v102
    %v183 = vunpack.c.l.b16 %v103
    %v184 = vunpack.c.l.b16 %v104
    %v185 = vunpack.c.l.b16 %v105
    %v186 = vunpack.c.l.b16 %v106
    %v187 = vunpack.c.l.b16 %v107
    %v188 = vunpack.c.l.b16 %v108
    %v189 = vunpack.c.l.b16 %v109
    %v190 = vunpack.c.l.b16 %v110
    %v191 = vunpack.c.l.b16 %v111
    %v192 = vunpack.c.l.b16 %v112
    %v193 = vunpack.c.l.b16 %v113
    %v194 = vunpack.c.l.b16 %v114
    %v195 = vpack.c.b16 %v180, %v179
    %v196 = vpack.c.b16 %v182, %v181
    %v197 = vpack.c.b16 %v184, %v183
    %v198 = vpack.c.b16 %v186, %v185
    %v199 = vpack.c.b16 %v188, %v187
    %v200 = vpack.c.b16 %v190, %v189
    %v201 = vpack.c.b16 %v192, %v191
    %v202 = vpack.c.b16 %v194, %v193
    %211 = vmatpush.bf16.msra.mxu0 %v202
    %212 = vmatpush.bf16.msra.mxu0 %v201
    %213 = vmatpush.bf16.msra.mxu0 %v200
    %214 = vmatpush.bf16.msra.mxu0 %v199
    %215 = vmatpush.bf16.msra.mxu0 %v198
    %216 = vmatpush.bf16.msra.mxu0 %v197
    %217 = vmatpush.bf16.msra.mxu0 %v196
    %218 = vmatpush.bf16.msra.mxu0 %v195
    %219 = vmatmul.bf16.gmra.mxu0 %v147
    %v220 = vpop.f32.mrf.mxu0
    %v221 = vadd.f32 0.0, %v220
    %v222 = vpop.f32.mrf.mxu0
    %v223 = vadd.f32 0.0, %v222
    %224 = vmatmul.bf16.gmra.mxu0 %v148
    %v225 = vpop.f32.mrf.mxu0
    %v226 = vadd.f32 0.0, %v225
    %v227 = vpop.f32.mrf.mxu0
    %v228 = vadd.f32 0.0, %v227
    %229 = vmatmul.bf16.gmra.mxu0 %v149
    %v230 = vpop.f32.mrf.mxu0
    %v231 = vadd.f32 0.0, %v230
    %v232 = vpop.f32.mrf.mxu0
    %v233 = vadd.f32 0.0, %v232
    %234 = vmatmul.bf16.gmra.mxu0 %v150
    %v235 = vpop.f32.mrf.mxu0
    %v236 = vadd.f32 0.0, %v235
    %v237 = vpop.f32.mrf.mxu0
    %v238 = vadd.f32 0.0, %v237
    %239 = vmatmul.bf16.gmra.mxu0 %v151
    %v240 = vpop.f32.mrf.mxu0
    %v241 = vadd.f32 0.0, %v240
    %v242 = vpop.f32.mrf.mxu0
    %v243 = vadd.f32 0.0, %v242
    %244 = vmatmul.bf16.gmra.mxu0 %v152
    %v245 = vpop.f32.mrf.mxu0
    %v246 = vadd.f32 0.0, %v245
    %v247 = vpop.f32.mrf.mxu0
    %v248 = vadd.f32 0.0, %v247
    %249 = vmatmul.bf16.gmra.mxu0 %v153
    %v250 = vpop.f32.mrf.mxu0
    %v251 = vadd.f32 0.0, %v250
    %v252 = vpop.f32.mrf.mxu0
    %v253 = vadd.f32 0.0, %v252
    %254 = vmatmul.bf16.gmra.mxu0 %v154
    %v255 = vpop.f32.mrf.mxu0
    %v256 = vadd.f32 0.0, %v255
    %v257 = vpop.f32.mrf.mxu0
    %v258 = vadd.f32 0.0, %v257
    %259 = vdwg.mxu0
    %v260 = vadd.f32 %v67, %v221
    %v261 = vadd.f32 %v68, %v223
    %v262 = vadd.f32 %v69, %v226
    %v263 = vadd.f32 %v70, %v228
    %v264 = vadd.f32 %v71, %v231
    %v265 = vadd.f32 %v72, %v233
    %v266 = vadd.f32 %v73, %v236
    %v267 = vadd.f32 %v74, %v238
    %v268 = vadd.f32 %v75, %v241
    %v269 = vadd.f32 %v76, %v243
    %v270 = vadd.f32 %v77, %v246
    %v271 = vadd.f32 %v78, %v248
    %v272 = vadd.f32 %v79, %v251
    %v273 = vadd.f32 %v80, %v253
    %v274 = vadd.f32 %v81, %v256
    %v275 = vadd.f32 %v82, %v258
    %276 = vst [vmem:[#allocation2] sm:$0xff] %v260
    %277 = vst [vmem:[#allocation2 + $0x8] sm:$0xff] %v261
    %278 = vst [vmem:[#allocation2 + $0x10] sm:$0xff] %v262
    %279 = vst [vmem:[#allocation2 + $0x18] sm:$0xff] %v263
    %280 = vst [vmem:[#allocation2 + $0x20] sm:$0xff] %v264
    %281 = vst [vmem:[#allocation2 + $0x28] sm:$0xff] %v265
    %282 = vst [vmem:[#allocation2 + $0x30] sm:$0xff] %v266
    %283 = vst [vmem:[#allocation2 + $0x38] sm:$0xff] %v267
    %284 = vst [vmem:[#allocation2 + $0x40] sm:$0xff] %v268
    %285 = vst [vmem:[#allocation2 + $0x48] sm:$0xff] %v269
    %286 = vst [vmem:[#allocation2 + $0x50] sm:$0xff] %v270
    %287 = vst [vmem:[#allocation2 + $0x58] sm:$0xff] %v271
    %288 = vst [vmem:[#allocation2 + $0x60] sm:$0xff] %v272
    %289 = vst [vmem:[#allocation2 + $0x68] sm:$0xff] %v273
    %290 = vst [vmem:[#allocation2 + $0x70] sm:$0xff] %v274
    %291 = vst [vmem:[#allocation2 + $0x78] sm:$0xff] %v275
    // Predicated region
    $region26: #{tpu_custom_call.1} parent=1 // pred_check
      %p292 = pneg %p47
    $region27: #{tpu_custom_call.1} parent=1 // pred_check_branch
      %294 = sbr.rel (%p292) target = $region29
    $region28: #{tpu_custom_call.1} parent=1 // pred_region
      %v295 = vld [vmem:[#allocation2] sm:$0xff]
      %v296 = vld [vmem:[#allocation2 + $0x8] sm:$0xff]
      %v297 = vld [vmem:[#allocation2 + $0x10] sm:$0xff]
      %v298 = vld [vmem:[#allocation2 + $0x18] sm:$0xff]
      %v299 = vld [vmem:[#allocation2 + $0x20] sm:$0xff]
      %v300 = vld [vmem:[#allocation2 + $0x28] sm:$0xff]
      %v301 = vld [vmem:[#allocation2 + $0x30] sm:$0xff]
      %v302 = vld [vmem:[#allocation2 + $0x38] sm:$0xff]
      %v303 = vld [vmem:[#allocation2 + $0x40] sm:$0xff]
      %v304 = vld [vmem:[#allocation2 + $0x48] sm:$0xff]
      %v305 = vld [vmem:[#allocation2 + $0x50] sm:$0xff]
      %v306 = vld [vmem:[#allocation2 + $0x58] sm:$0xff]
      %v307 = vld [vmem:[#allocation2 + $0x60] sm:$0xff]
      %v308 = vld [vmem:[#allocation2 + $0x68] sm:$0xff]
      %v309 = vld [vmem:[#allocation2 + $0x70] sm:$0xff]
      %v310 = vld [vmem:[#allocation2 + $0x78] sm:$0xff]
      %v311 = vld [vmem:[%s2] sm:$0x1]
      %v313 = vperm.slane %v311, 0
      %v315 = vadd.f32 %v295, %v313
      %v316 = vadd.f32 %v296, %v313
      %v317 = vadd.f32 %v297, %v313
      %v318 = vadd.f32 %v298, %v313
      %v319 = vadd.f32 %v299, %v313
      %v320 = vadd.f32 %v300, %v313
      %v321 = vadd.f32 %v301, %v313
      %v322 = vadd.f32 %v302, %v313
      %v323 = vadd.f32 %v303, %v313
      %v324 = vadd.f32 %v304, %v313
      %v325 = vadd.f32 %v305, %v313
      %v326 = vadd.f32 %v306, %v313
      %v327 = vadd.f32 %v307, %v313
      %v328 = vadd.f32 %v308, %v313
      %v329 = vadd.f32 %v309, %v313
      %v330 = vadd.f32 %v310, %v313
      %v331 = vmax.f32 %v315, 0.0
      %v332 = vmax.f32 %v316, 0.0
      %v333 = vmax.f32 %v317, 0.0
      %v334 = vmax.f32 %v318, 0.0
      %v335 = vmax.f32 %v319, 0.0
      %v336 = vmax.f32 %v320, 0.0
      %v337 = vmax.f32 %v321, 0.0
      %v338 = vmax.f32 %v322, 0.0
      %v339 = vmax.f32 %v323, 0.0
      %v340 = vmax.f32 %v324, 0.0
      %v341 = vmax.f32 %v325, 0.0
      %v342 = vmax.f32 %v326, 0.0
      %v343 = vmax.f32 %v327, 0.0
      %v344 = vmax.f32 %v328, 0.0
      %v345 = vmax.f32 %v329, 0.0
      %v346 = vmax.f32 %v330, 0.0
      %347 = vst [vmem:[#allocation8] sm:$0xff] %v331
      %348 = vst [vmem:[#allocation8 + $0x8] sm:$0xff] %v332
      %349 = vst [vmem:[#allocation8 + $0x10] sm:$0xff] %v333
      %350 = vst [vmem:[#allocation8 + $0x18] sm:$0xff] %v334
      %351 = vst [vmem:[#allocation8 + $0x20] sm:$0xff] %v335
      %352 = vst [vmem:[#allocation8 + $0x28] sm:$0xff] %v336
      %353 = vst [vmem:[#allocation8 + $0x30] sm:$0xff] %v337
      %354 = vst [vmem:[#allocation8 + $0x38] sm:$0xff] %v338
      %355 = vst [vmem:[#allocation8 + $0x40] sm:$0xff] %v339
      %356 = vst [vmem:[#allocation8 + $0x48] sm:$0xff] %v340
      %357 = vst [vmem:[#allocation8 + $0x50] sm:$0xff] %v341
      %358 = vst [vmem:[#allocation8 + $0x58] sm:$0xff] %v342
      %359 = vst [vmem:[#allocation8 + $0x60] sm:$0xff] %v343
      %360 = vst [vmem:[#allocation8 + $0x68] sm:$0xff] %v344
      %361 = vst [vmem:[#allocation8 + $0x70] sm:$0xff] %v345
      %362 = vst [vmem:[#allocation8 + $0x78] sm:$0xff] %v346
    $region29: #{tpu_custom_call.1} parent=1 // pred_fallthru
      _
    // Predicated region
    $region30: #{tpu_custom_call.1} parent=1 // pred_check
      _
    $region31: #{tpu_custom_call.1} parent=1 // pred_check_branch
      %364 = sbr.rel (0) target = $region33
    $region32: #{tpu_custom_call.1} parent=1 // pred_region
      %366 = vsyncadd [#allocation5], 0
      %s367 = sshll.u32 [#allocation8], 4
      %s368 = int_to_ptr.vmem [resolvable:$true] %s367
      %s369 = sshll.u32 %s3, 4
      %s370 = int_to_ptr.hbm [resolvable:$true] %s369
      %375 = dma.vmem_to_hbm [thread:$0]  %s368, 2048, %s370, [#allocation5], 128, 128, 8
    $region33: #{tpu_custom_call.1} parent=1 // pred_fallthru
      _
    // Predicated region
    $region34: #{tpu_custom_call.1} parent=1 // pred_check
      _
    $region35: #{tpu_custom_call.1} parent=1 // pred_check_branch
      %377 = sbr.rel (0) target = $region37
    $region36: #{tpu_custom_call.1} parent=1 // pred_region
      %379 = dma.done [#allocation5], 2048
    $region37: #{tpu_custom_call.1} parent=1 // pred_fallthru
      _
    %380 = vsyncpa [#allocation4], 1
    %381 = vsyncpa [#allocation7], 1
    %382 = vsyncpa [#allocation5], 1

</llo_original>
